<compile_context>
chip_gen: v6e
topology: v6e:2x2x1
jax: 0.10.0
libtpu: 0.0.40
codegen_flags: <defaults>
</compile_context>

<pallas_src>
import jax
import jax.numpy as jnp
from jax.experimental import pallas as pl
from jax.experimental.pallas import tpu as pltpu


# ----------------------------------------------------------------------------- kernel
def actor_kernel(obs_t_ref, w1t_ref, b1_ref, wht_ref, bh_ref, lo_ref, hi_ref, out_ref):
    # layer 0 (transposed): h_T = relu(W1^T @ obs^T + b1)          -> (h0, tile_b)
    h = jnp.dot(w1t_ref[...], obs_t_ref[...], preferred_element_type=jnp.float32)
    h = jnp.maximum(h + b1_ref[...], 0.0)

    # fused (shared output layer ∘ heads): out_T = Wh^T @ h_T + bh -> (2A, tile_b)
    out = jnp.dot(wht_ref[...], h.astype(wht_ref.dtype),
                  preferred_element_type=jnp.float32) + bh_ref[...]

    # per-row clamp bounds: mean rows (-inf, +inf) pass through,
    # log_std rows clamp to (-20, 2).  One max + one min per vreg.
    out = jnp.minimum(jnp.maximum(out, lo_ref[...]), hi_ref[...])

    out_ref[...] = out.astype(out_ref.dtype)


# ----------------------------------------------------------------------- param prep
def fuse_actor_params(params, io_dtype=jnp.float32):
    """Fold the Identity-activation shared output layer into the heads, transpose the
    weights for the lane-dense kernel, and build per-row clamp bounds.  Run ONCE per
    parameter update (hoisted out of the per-call path)."""
    w1, b1, w2, b2, wm, bm, ws, bs = params
    action_dim = wm.shape[1]

    w_heads = jnp.concatenate([wm, ws], axis=1)         # (h1, 2A)
    b_heads = jnp.concatenate([bm, bs], axis=1)          # (1, 2A)
    wh = w2 @ w_heads                                    # (h0, 2A)
    bh = b2 @ w_heads + b_heads                          # (1, 2A)

    fused = {
        "action_dim": action_dim,
        "w1t": jnp.asarray(w1.T, io_dtype),              # (h0, obs_dim)
        "wht": jnp.asarray(wh.T, io_dtype),              # (2A, h0)
        # biases / clamp bounds stay f32 (v5e VPU has no bf16 arithmetic)
        "b1c": jnp.asarray(b1.reshape(-1, 1), jnp.float32),   # (h0, 1)
        "bhc": jnp.asarray(bh.reshape(-1, 1), jnp.float32),   # (2A, 1)
        "lo": jnp.concatenate([jnp.full((action_dim, 1), -jnp.inf, jnp.float32),
                               jnp.full((action_dim, 1), -20.0, jnp.float32)], axis=0),
        "hi": jnp.concatenate([jnp.full((action_dim, 1), jnp.inf, jnp.float32),
                               jnp.full((action_dim, 1), 2.0, jnp.float32)], axis=0),
        "io_dtype": io_dtype,
    }
    return fused


def _resident(a):
    """Weights / biases / bounds stay in VMEM across all grid steps."""
    nd = a.ndim
    return pl.BlockSpec(a.shape, lambda i, _nd=nd: (0,) * _nd)


# -------------------------------------------------------------------------- forward
def actor_forward_packed_t(obs, fused, *, max_tile_b=16384, core_parallel=False):
    """Lane-dense forward: returns the packed transposed slab (2A, padded_b) where rows
    [0,A) are mean^T and rows [A,2A) are clamped log_std^T, plus the true batch size."""
    w1t, b1c = fused["w1t"], fused["b1c"]
    wht, bhc = fused["wht"], fused["bhc"]
    lo, hi = fused["lo"], fused["hi"]
    io_dtype = fused["io_dtype"]
    action_dim = fused["action_dim"]
    out_w = 2 * action_dim

    B, obs_dim = obs.shape

    # ---- tile selection: multiple of 128 lanes, last tile nearly full -----------
    max_tile_b = max(128, (int(max_tile_b) // 128) * 128)
    n_tiles = pl.cdiv(B, max_tile_b)
    tile_b = -(-B // n_tiles)                 # ceil(B / n_tiles)
    tile_b = -(-tile_b // 128) * 128          # round up to lane multiple
    padded_b = n_tiles * tile_b               # pad < 128 rows per tile

    # ---- batch-on-lanes layout: (obs_dim, padded_b); pad+transpose fuse in XLA ---
    obs_p = obs if padded_b == B else jnp.pad(obs, ((0, padded_b - B), (0, 0)))
    obs_t = obs_p.T.astype(io_dtype)

    if core_parallel:
        # v7x: shard batch tiles across both TensorCores.
        dim_sem = (pltpu.CORE_PARALLEL,)
    else:
        dim_sem = ("parallel",)
    # TODO(synk): flip core_parallel=True by default once validated on the target
    # v7x fleet; single-TC parts (v5e/v6e) keep the plain "parallel" semantics.

    out_t = pl.pallas_call(
        actor_kernel,
        out_shape=jax.ShapeDtypeStruct((out_w, padded_b), io_dtype),
        grid=(padded_b // tile_b,),
        in_specs=[
            pl.BlockSpec((obs_dim, tile_b), lambda i: (0, i)),
            _resident(w1t), _resident(b1c),
            _resident(wht), _resident(bhc),
            _resident(lo), _resident(hi),
        ],
        out_specs=pl.BlockSpec((out_w, tile_b), lambda i: (0, i)),
        compiler_params=pltpu.CompilerParams(dimension_semantics=dim_sem),
    )(obs_t, w1t, b1c, wht, bhc, lo, hi)

    return out_t, B


def actor_forward(obs, fused, *, max_tile_b=16384, core_parallel=False):
    """Actor.forward(): returns (mean, log_std), each (B, action_dim).

    The split/transpose below is lazy layout plumbing; consumers that can work on the
    packed transposed slab should call actor_forward_packed_t() directly."""
    action_dim = fused["action_dim"]
    out_t, B = actor_forward_packed_t(obs, fused, max_tile_b=max_tile_b,
                                      core_parallel=core_parallel)
    mean = out_t[:action_dim, :B].T
    log_std = out_t[action_dim:, :B].T
    return mean, log_std


# ------------------------------------------------------------------------ reference
def init_actor_params(key, obs_dim, hidden_dims, action_dim):
    """Deterministic synthetic init mirroring the PyTorch __init__ ranges."""
    h0, h1 = hidden_dims  # shared MLP: obs_dim -> h0 (relu) -> h1 (identity)
    k1, k2, k3, k4, k5, k6 = jax.random.split(key, 6)

    # layer 0: xavier_uniform weight, zero bias
    lim1 = (6.0 / (obs_dim + h0)) ** 0.5
    w1 = jax.random.uniform(k1, (obs_dim, h0), jnp.float32, -lim1, lim1)
    b1 = jnp.zeros((1, h0), jnp.float32)

    # layer 1 (MLP output layer): torch default Linear init ~ U(-1/sqrt(in), 1/sqrt(in))
    lim2 = 1.0 / (h0 ** 0.5)
    w2 = jax.random.uniform(k2, (h0, h1), jnp.float32, -lim2, lim2)
    b2 = jax.random.uniform(k3, (1, h1), jnp.float32, -lim2, lim2)

    # heads: uniform(-0.003, 0.003) for weights and biases
    wm = jax.random.uniform(k4, (h1, action_dim), jnp.float32, -0.003, 0.003)
    bm = jax.random.uniform(k5, (1, action_dim), jnp.float32, -0.003, 0.003)
    ws = jax.random.uniform(k6, (h1, action_dim), jnp.float32, -0.003, 0.003)
    bs = jax.random.uniform(jax.random.fold_in(key, 99),
                            (1, action_dim), jnp.float32, -0.003, 0.003)
    return (w1, b1, w2, b2, wm, bm, ws, bs)


def actor_forward_ref(obs, params):
    """Pure-JAX reference (unfused) for correctness checking."""
    w1, b1, w2, b2, wm, bm, ws, bs = params
    h = jnp.maximum(obs @ w1 + b1, 0.0)
    shared = h @ w2 + b2
    mean = shared @ wm + bm
    log_std = jnp.clip(shared @ ws + bs, -20.0, 2.0)
    return mean, log_std


# ----------------------------------------------------------------------------- main
if __name__ == "__main__":
    key = jax.random.PRNGKey(0)
    obs_dim, action_dim = 16, 8
    hidden_dims = [32, 32]

    pk, ok1, ok2 = jax.random.split(key, 3)
    params = init_actor_params(pk, obs_dim, hidden_dims, action_dim)
    fused_f32 = fuse_actor_params(params)                       # f32 I/O path
    fused_bf16 = fuse_actor_params(params, io_dtype=jnp.bfloat16)  # low-HBM-traffic path

    # Case 1: small batch (pads to one 128-lane tile).
    obs = jax.random.normal(ok1, (8, obs_dim), jnp.float32)
    mean, log_std = actor_forward(obs, fused_f32)
    jax.block_until_ready((mean, log_std))
    mean_ref, log_std_ref = actor_forward_ref(obs, params)
    assert mean.shape == (8, action_dim)
    assert log_std.shape == (8, action_dim)
    assert jnp.allclose(mean, mean_ref, atol=1e-5, rtol=1e-4)
    assert jnp.allclose(log_std, log_std_ref, atol=1e-5, rtol=1e-4)

    # Case 2: ragged batch exercises the lane-padding path.
    obs2 = jax.random.normal(ok2, (20, obs_dim), jnp.float32)
    mean2, log_std2 = actor_forward(obs2, fused_f32)
    jax.block_until_ready((mean2, log_std2))
    mean2_ref, log_std2_ref = actor_forward_ref(obs2, params)
    assert jnp.allclose(mean2, mean2_ref, atol=1e-5, rtol=1e-4)
    assert jnp.allclose(log_std2, log_std2_ref, atol=1e-5, rtol=1e-4)

    # Case 3: bf16 I/O path (f32 MXU accumulation / bias / clamp), loose tolerance.
    mean_b, log_std_b = actor_forward(obs2, fused_bf16)
    jax.block_until_ready((mean_b, log_std_b))
    assert mean_b.shape == (20, action_dim) and log_std_b.shape == (20, action_dim)
    assert jnp.allclose(mean_b.astype(jnp.float32), mean2_ref, atol=5e-3, rtol=5e-2)
    assert jnp.allclose(log_std_b.astype(jnp.float32), log_std2_ref, atol=5e-3, rtol=5e-2)

    # TODO(synk): Actor.sample() / get_action() (Gaussian rsample + tanh squash +
    # log_prob) are not in the kernel; only the forward() hot path is implemented.
    print("KERNEL_OK")
</pallas_src>

<mosaic_0001>
module attributes {stable_mosaic.version = 11 : i64} {
  func.func @actor_kernel(%arg0: i32, %arg1: memref<16x128xf32, #tpu.memory_space<vmem>>, %arg2: memref<32x16xf32, #tpu.memory_space<vmem>>, %arg3: memref<32x1xf32, #tpu.memory_space<vmem>>, %arg4: memref<16x32xf32, #tpu.memory_space<vmem>>, %arg5: memref<16x1xf32, #tpu.memory_space<vmem>>, %arg6: memref<16x1xf32, #tpu.memory_space<vmem>>, %arg7: memref<16x1xf32, #tpu.memory_space<vmem>>, %arg8: memref<16x128xf32, #tpu.memory_space<vmem>>) attributes {dimension_semantics = [#tpu.dimension_semantics<parallel>], iteration_bounds = array<i64: 1>, scalar_prefetch = 0 : i64, scratch_operands = 0 : i64, tpu.core_type = #tpu.core_type<tc>, window_params = [{transform_indices = @transform_0, window_bounds = array<i64: 16, 128>}, {pipeline_mode = #tpu.pipeline_mode<synchronous>, transform_indices = @transform_1, window_bounds = array<i64: 32, 16>}, {pipeline_mode = #tpu.pipeline_mode<synchronous>, transform_indices = @transform_2, window_bounds = array<i64: 32, 1>}, {pipeline_mode = #tpu.pipeline_mode<synchronous>, transform_indices = @transform_3, window_bounds = array<i64: 16, 32>}, {pipeline_mode = #tpu.pipeline_mode<synchronous>, transform_indices = @transform_4, window_bounds = array<i64: 16, 1>}, {pipeline_mode = #tpu.pipeline_mode<synchronous>, transform_indices = @transform_5, window_bounds = array<i64: 16, 1>}, {pipeline_mode = #tpu.pipeline_mode<synchronous>, transform_indices = @transform_6, window_bounds = array<i64: 16, 1>}, {transform_indices = @transform_7, window_bounds = array<i64: 16, 128>}]} {
    %c0 = arith.constant 0 : index
    %c0_0 = arith.constant 0 : index
    %0 = vector.load %arg2[%c0, %c0_0] : memref<32x16xf32, #tpu.memory_space<vmem>>, vector<32x16xf32>
    %c0_1 = arith.constant 0 : index
    %c0_2 = arith.constant 0 : index
    %1 = vector.load %arg1[%c0_1, %c0_2] : memref<16x128xf32, #tpu.memory_space<vmem>>, vector<16x128xf32>
    %cst = arith.constant dense<0.000000e+00> : vector<32x128xf32>
    %2 = tpu.matmul %0, %1, %cst {dimension_numbers = #tpu.dot_dimension_numbers<[1], [0], [0], [1], [0, 0, 1, 1], [], []>} : vector<32x16xf32>, vector<16x128xf32>, vector<32x128xf32> -> vector<32x128xf32>
    %c0_3 = arith.constant 0 : index
    %c0_4 = arith.constant 0 : index
    %3 = vector.load %arg3[%c0_3, %c0_4] : memref<32x1xf32, #tpu.memory_space<vmem>>, vector<32x1xf32>
    %4 = vector.broadcast %3 : vector<32x1xf32> to vector<32x128xf32>
    %5 = arith.addf %2, %4 : vector<32x128xf32>
    %cst_5 = arith.constant 0.000000e+00 : f32
    %6 = vector.broadcast %cst_5 : f32 to vector<32x128xf32>
    %7 = arith.maximumf %5, %6 : vector<32x128xf32>
    %c0_6 = arith.constant 0 : index
    %c0_7 = arith.constant 0 : index
    %8 = vector.load %arg4[%c0_6, %c0_7] : memref<16x32xf32, #tpu.memory_space<vmem>>, vector<16x32xf32>
    %cst_8 = arith.constant dense<0.000000e+00> : vector<16x128xf32>
    %9 = tpu.matmul %8, %7, %cst_8 {dimension_numbers = #tpu.dot_dimension_numbers<[1], [0], [0], [1], [0, 0, 1, 1], [], []>} : vector<16x32xf32>, vector<32x128xf32>, vector<16x128xf32> -> vector<16x128xf32>
    %c0_9 = arith.constant 0 : index
    %c0_10 = arith.constant 0 : index
    %10 = vector.load %arg5[%c0_9, %c0_10] : memref<16x1xf32, #tpu.memory_space<vmem>>, vector<16x1xf32>
    %11 = vector.broadcast %10 : vector<16x1xf32> to vector<16x128xf32>
    %12 = arith.addf %9, %11 : vector<16x128xf32>
    %c0_11 = arith.constant 0 : index
    %c0_12 = arith.constant 0 : index
    %13 = vector.load %arg6[%c0_11, %c0_12] : memref<16x1xf32, #tpu.memory_space<vmem>>, vector<16x1xf32>
    %14 = vector.broadcast %13 : vector<16x1xf32> to vector<16x128xf32>
    %15 = arith.maximumf %12, %14 : vector<16x128xf32>
    %c0_13 = arith.constant 0 : index
    %c0_14 = arith.constant 0 : index
    %16 = vector.load %arg7[%c0_13, %c0_14] : memref<16x1xf32, #tpu.memory_space<vmem>>, vector<16x1xf32>
    %17 = vector.broadcast %16 : vector<16x1xf32> to vector<16x128xf32>
    %18 = arith.minimumf %15, %17 : vector<16x128xf32>
    %c0_15 = arith.constant 0 : index
    %c0_16 = arith.constant 0 : index
    %19 = vector.load %arg8[%c0_15, %c0_16] : memref<16x128xf32, #tpu.memory_space<vmem>>, vector<16x128xf32>
    tpu.vector_store %arg8[%c0_15, %c0_16], %18 {strides = array<i32>} : memref<16x128xf32, #tpu.memory_space<vmem>>, vector<16x128xf32>,
    return
  }
  func.func @transform_0(%arg0: i32) -> (i32, i32) {
    %c0_i32 = arith.constant 0 : i32
    %c0_i32_0 = arith.constant 0 : i32
    return %c0_i32, %arg0 : i32, i32
  }
  func.func @transform_1(%arg0: i32) -> (i32, i32) {
    %c0_i32 = arith.constant 0 : i32
    %c0_i32_0 = arith.constant 0 : i32
    %c0_i32_1 = arith.constant 0 : i32
    return %c0_i32, %c0_i32_0 : i32, i32
  }
  func.func @transform_2(%arg0: i32) -> (i32, i32) {
    %c0_i32 = arith.constant 0 : i32
    %c0_i32_0 = arith.constant 0 : i32
    %c0_i32_1 = arith.constant 0 : i32
    return %c0_i32, %c0_i32_0 : i32, i32
  }
  func.func @transform_3(%arg0: i32) -> (i32, i32) {
    %c0_i32 = arith.constant 0 : i32
    %c0_i32_0 = arith.constant 0 : i32
    %c0_i32_1 = arith.constant 0 : i32
    return %c0_i32, %c0_i32_0 : i32, i32
  }
  func.func @transform_4(%arg0: i32) -> (i32, i32) {
    %c0_i32 = arith.constant 0 : i32
    %c0_i32_0 = arith.constant 0 : i32
    %c0_i32_1 = arith.constant 0 : i32
    return %c0_i32, %c0_i32_0 : i32, i32
  }
  func.func @transform_5(%arg0: i32) -> (i32, i32) {
    %c0_i32 = arith.constant 0 : i32
    %c0_i32_0 = arith.constant 0 : i32
    %c0_i32_1 = arith.constant 0 : i32
    return %c0_i32, %c0_i32_0 : i32, i32
  }
  func.func @transform_6(%arg0: i32) -> (i32, i32) {
    %c0_i32 = arith.constant 0 : i32
    %c0_i32_0 = arith.constant 0 : i32
    %c0_i32_1 = arith.constant 0 : i32
    return %c0_i32, %c0_i32_0 : i32, i32
  }
  func.func @transform_7(%arg0: i32) -> (i32, i32) {
    %c0_i32 = arith.constant 0 : i32
    %c0_i32_0 = arith.constant 0 : i32
    return %c0_i32, %arg0 : i32, i32
  }
}

</mosaic_0001>

<llo_original>
// kernel: tpu_custom_call.1
$region0: #{tpu_custom_call.1}
  #allocation0 [shape = 'u32[]', space=smem, size = 0x4, offset = 0x4, fixed_abs, tag = 'smem constant byte address 0x4 - core index']
  #allocation1 [shape = 'u32[144,128]{1,0:T(1,128)}', space=vmem, size = 0x12000, scoped, tag = 'internal scratch']
  %s0 = inlined_call_operand.vmem [shape: f32[16,128], index: 0, kind: input, shape index: {}]
  %s1 = inlined_call_operand.vmem [shape: f32[32,16], index: 1, kind: input, shape index: {}]
  %s2 = inlined_call_operand.vmem [shape: f32[32,1], index: 2, kind: input, shape index: {}]
  %s3 = inlined_call_operand.vmem [shape: f32[16,32], index: 3, kind: input, shape index: {}]
  %s4 = inlined_call_operand.vmem [shape: f32[16,1], index: 4, kind: input, shape index: {}]
  %s5 = inlined_call_operand.vmem [shape: f32[16,1], index: 5, kind: input, shape index: {}]
  %s6 = inlined_call_operand.vmem [shape: f32[16,1], index: 6, kind: input, shape index: {}]
  %s7 = inlined_call_operand.hbm [shape: f32[16,128], index: 7, kind: output, shape index: {}]
  %s8 = sld [smem:[#allocation0]]
  $region38: #{tpu_custom_call.1} parent=0
    _
  %s10 = ssub.s32 1, %s8
  %s11 = scalar_select 0, %s10, %s8
  $region1: #{tpu_custom_call.1} parent=0
    #allocation2 [shape = 'u8[8192]{0}', space=vmem, size = 0x2000, scoped, tag = 'output window, operand 0, single buffered']
    #allocation3 [shape = 's32[1]{0}', space=sflag, size = 0x4, scoped, tag = 'scoped memory for tpu_custom_call.1']
    %12 = vsyncpa [#allocation3], 0
    // Predicated region
    $region2: #{tpu_custom_call.1} parent=1 // pred_check
      _
    $region3: #{tpu_custom_call.1} parent=1 // pred_check_branch
      %14 = sbr.rel (0) target = $region5
    $region4: #{tpu_custom_call.1} parent=1 // pred_region
      _
    $region5: #{tpu_custom_call.1} parent=1 // pred_fallthru
      _
    // Predicated region
    $region6: #{tpu_custom_call.1} parent=1 // pred_check
      _
    $region7: #{tpu_custom_call.1} parent=1 // pred_check_branch
      %16 = sbr.rel (0) target = $region9
    $region8: #{tpu_custom_call.1} parent=1 // pred_region
      _
    $region9: #{tpu_custom_call.1} parent=1 // pred_fallthru
      _
    // Predicated region
    $region10: #{tpu_custom_call.1} parent=1 // pred_check
      _
    $region11: #{tpu_custom_call.1} parent=1 // pred_check_branch
      %18 = sbr.rel (0) target = $region13
    $region12: #{tpu_custom_call.1} parent=1 // pred_region
      _
    $region13: #{tpu_custom_call.1} parent=1 // pred_fallthru
      _
    // Predicated region
    $region14: #{tpu_custom_call.1} parent=1 // pred_check
      _
    $region15: #{tpu_custom_call.1} parent=1 // pred_check_branch
      %20 = sbr.rel (0) target = $region17
    $region16: #{tpu_custom_call.1} parent=1 // pred_region
      _
    $region17: #{tpu_custom_call.1} parent=1 // pred_fallthru
      _
    // Predicated region
    $region18: #{tpu_custom_call.1} parent=1 // pred_check
      _
    $region19: #{tpu_custom_call.1} parent=1 // pred_check_branch
      %22 = sbr.rel (0) target = $region21
    $region20: #{tpu_custom_call.1} parent=1 // pred_region
      _
    $region21: #{tpu_custom_call.1} parent=1 // pred_fallthru
      _
    // Predicated region
    $region22: #{tpu_custom_call.1} parent=1 // pred_check
      _
    $region23: #{tpu_custom_call.1} parent=1 // pred_check_branch
      %24 = sbr.rel (0) target = $region25
    $region24: #{tpu_custom_call.1} parent=1 // pred_region
      _
    $region25: #{tpu_custom_call.1} parent=1 // pred_fallthru
      _
    // Predicated region
    $region26: #{tpu_custom_call.1} parent=1 // pred_check
      _
    $region27: #{tpu_custom_call.1} parent=1 // pred_check_branch
      %26 = sbr.rel (0) target = $region29
    $region28: #{tpu_custom_call.1} parent=1 // pred_region
      _
    $region29: #{tpu_custom_call.1} parent=1 // pred_fallthru
      _
    %v27 = vld [vmem:[%s1] sm:$0xff]
    %v28 = vld [vmem:[%s1 + $0x8] sm:$0xff]
    %v29 = vld [vmem:[%s1 + $0x10] sm:$0xff]
    %v30 = vld [vmem:[%s1 + $0x18] sm:$0xff]
    %v31 = vld [vmem:[%s0] sm:$0xff]
    %v32 = vld [vmem:[%s0 + $0x8] sm:$0xff]
    %v33 = vld [vmem:[%s2] sm:$0xff]
    %v34 = vld [vmem:[%s2 + $0x8] sm:$0xff]
    %v35 = vld [vmem:[%s2 + $0x10] sm:$0xff]
    %v36 = vld [vmem:[%s2 + $0x18] sm:$0xff]
    %38 = vset.pattern.permute.xlu0 0
    %39 = vperm.xlu0 %38, %v33
    %v40 = vpop.permute.xlu0 %39
    %43 = vset.pattern.permute.xlu0 0
    %44 = vperm.xlu0 %43, %v34
    %v45 = vpop.permute.xlu0 %44
    %48 = vset.pattern.permute.xlu0 0
    %49 = vperm.xlu0 %48, %v35
    %v50 = vpop.permute.xlu0 %49
    %53 = vset.pattern.permute.xlu0 0
    %54 = vperm.xlu0 %53, %v36
    %v55 = vpop.permute.xlu0 %54
    %vm57 = vcmask 130048
    %v59 = vsel %vm57, %v27, 0
    %v62 = vsel %vm57, %v28, 0
    %v65 = vsel %vm57, %v29, 0
    %v68 = vsel %vm57, %v30, 0
    %70 = vmatprep.subr.mxu0 0.0
    %71 = vmatpush1.msra.mxu0 0.0
    %72 = vmatprep.subr.mxu0 0.0
    %73 = vmatpush1.msra.mxu0 0.0
    %74 = vmatprep.subr.mxu0 0.0
    %75 = vmatpush1.msra.mxu0 0.0
    %76 = vmatprep.subr.mxu0 0.0
    %77 = vmatpush1.msra.mxu0 0.0
    %78 = vmatprep.subr.mxu0 0.0
    %79 = vmatpush1.msra.mxu0 0.0
    %80 = vmatprep.subr.mxu0 0.0
    %81 = vmatpush1.msra.mxu0 0.0
    %82 = vmatprep.subr.mxu0 0.0
    %83 = vmatpush1.msra.mxu0 0.0
    %84 = vmatprep.subr.mxu0 0.0
    %85 = vmatpush1.msra.mxu0 0.0
    %86 = vmatprep.subr.mxu0 0.0
    %87 = vmatpush1.msra.mxu0 0.0
    %88 = vmatprep.subr.mxu0 0.0
    %89 = vmatpush1.msra.mxu0 0.0
    %90 = vmatprep.subr.mxu0 0.0
    %91 = vmatpush1.msra.mxu0 0.0
    %92 = vmatprep.subr.mxu0 0.0
    %93 = vmatpush1.msra.mxu0 0.0
    %94 = vmatprep.subr.mxu0 0.0
    %95 = vmatpush1.msra.mxu0 0.0
    %96 = vmatprep.subr.mxu0 0.0
    %97 = vmatpush1.msra.mxu0 0.0
    %98 = vmatprep.subr.mxu0 0.0
    %99 = vmatpush1.msra.mxu0 %v32
    %100 = vmatprep.subr.mxu0 0.0
    %101 = vmatpush1.msra.mxu0 %v31
    %102 = vmatprep.subr.mxu0 0.0
    %103 = vmatpush2.msra.mxu0 0.0
    %104 = vmatprep.subr.mxu0 0.0
    %105 = vmatpush2.msra.mxu0 0.0
    %106 = vmatprep.subr.mxu0 0.0
    %107 = vmatpush2.msra.mxu0 0.0
    %108 = vmatprep.subr.mxu0 0.0
    %109 = vmatpush2.msra.mxu0 0.0
    %110 = vmatprep.subr.mxu0 0.0
    %111 = vmatpush2.msra.mxu0 0.0
    %112 = vmatprep.subr.mxu0 0.0
    %113 = vmatpush2.msra.mxu0 0.0
    %114 = vmatprep.subr.mxu0 0.0
    %115 = vmatpush2.msra.mxu0 0.0
    %116 = vmatprep.subr.mxu0 0.0
    %117 = vmatpush2.msra.mxu0 0.0
    %118 = vmatprep.subr.mxu0 0.0
    %119 = vmatpush2.msra.mxu0 0.0
    %120 = vmatprep.subr.mxu0 0.0
    %121 = vmatpush2.msra.mxu0 0.0
    %122 = vmatprep.subr.mxu0 0.0
    %123 = vmatpush2.msra.mxu0 0.0
    %124 = vmatprep.subr.mxu0 0.0
    %125 = vmatpush2.msra.mxu0 0.0
    %126 = vmatprep.subr.mxu0 0.0
    %127 = vmatpush2.msra.mxu0 0.0
    %128 = vmatprep.subr.mxu0 0.0
    %129 = vmatpush2.msra.mxu0 0.0
    %130 = vmatprep.subr.mxu0 0.0
    %131 = vmatpush2.msra.mxu0 0.0
    %132 = vmatprep.subr.mxu0 0.0
    %133 = vmatpush2.msra.mxu0 0.0
    %134 = vmatprep.mubr.f32.mxu0 0.0
    %135 = vmatmul.mubr.f32.gmra.mxu0 %v59
    %v136 = vpop.f32.mrf.mxu0
    %v137 = vadd.f32 %v40, %v136
    %v138 = vpop.f32.mrf.mxu0
    %139 = vmatprep.mubr.f32.mxu0 0.0
    %140 = vmatmul.mubr.f32.gmra.mxu0 %v62
    %v141 = vpop.f32.mrf.mxu0
    %v142 = vadd.f32 %v45, %v141
    %v143 = vpop.f32.mrf.mxu0
    %144 = vmatprep.mubr.f32.mxu0 0.0
    %145 = vmatmul.mubr.f32.gmra.mxu0 %v65
    %v146 = vpop.f32.mrf.mxu0
    %v147 = vadd.f32 %v50, %v146
    %v148 = vpop.f32.mrf.mxu0
    %149 = vmatprep.mubr.f32.mxu0 0.0
    %150 = vmatmul.mubr.f32.gmra.mxu0 %v68
    %v151 = vpop.f32.mrf.mxu0
    %v152 = vadd.f32 %v55, %v151
    %v153 = vpop.f32.mrf.mxu0
    %154 = vdwg.mxu0
    %v155 = vmax.f32 %v137, 0.0
    %v156 = vmax.f32 %v142, 0.0
    %v157 = vmax.f32 %v147, 0.0
    %v158 = vmax.f32 %v152, 0.0
    %v159 = vld [vmem:[%s3] sm:$0xff]
    %v160 = vld [vmem:[%s3 + $0x8] sm:$0xff]
    %v161 = vld [vmem:[%s4] sm:$0xff]
    %v162 = vld [vmem:[%s4 + $0x8] sm:$0xff]
    %164 = vset.pattern.permute.xlu0 0
    %165 = vperm.xlu0 %164, %v161
    %v166 = vpop.permute.xlu0 %165
    %169 = vset.pattern.permute.xlu0 0
    %170 = vperm.xlu0 %169, %v162
    %v171 = vpop.permute.xlu0 %170
    %vm173 = vcmask 261120
    %v175 = vsel %vm173, %v159, 0
    %v178 = vsel %vm173, %v160, 0
    %180 = vmatprep.subr.mxu0 0.0
    %181 = vmatpush1.msra.mxu0 0.0
    %182 = vmatprep.subr.mxu0 0.0
    %183 = vmatpush1.msra.mxu0 0.0
    %184 = vmatprep.subr.mxu0 0.0
    %185 = vmatpush1.msra.mxu0 0.0
    %186 = vmatprep.subr.mxu0 0.0
    %187 = vmatpush1.msra.mxu0 0.0
    %188 = vmatprep.subr.mxu0 0.0
    %189 = vmatpush1.msra.mxu0 0.0
    %190 = vmatprep.subr.mxu0 0.0
    %191 = vmatpush1.msra.mxu0 0.0
    %192 = vmatprep.subr.mxu0 0.0
    %193 = vmatpush1.msra.mxu0 0.0
    %194 = vmatprep.subr.mxu0 0.0
    %195 = vmatpush1.msra.mxu0 0.0
    %196 = vmatprep.subr.mxu0 0.0
    %197 = vmatpush1.msra.mxu0 0.0
    %198 = vmatprep.subr.mxu0 0.0
    %199 = vmatpush1.msra.mxu0 0.0
    %200 = vmatprep.subr.mxu0 0.0
    %201 = vmatpush1.msra.mxu0 0.0
    %202 = vmatprep.subr.mxu0 0.0
    %203 = vmatpush1.msra.mxu0 0.0
    %204 = vmatprep.subr.mxu0 0.0
    %205 = vmatpush1.msra.mxu0 %v158
    %206 = vmatprep.subr.mxu0 0.0
    %207 = vmatpush1.msra.mxu0 %v157
    %208 = vmatprep.subr.mxu0 0.0
    %209 = vmatpush1.msra.mxu0 %v156
    %210 = vmatprep.subr.mxu0 0.0
    %211 = vmatpush1.msra.mxu0 %v155
    %212 = vmatprep.subr.mxu0 0.0
    %213 = vmatpush2.msra.mxu0 0.0
    %214 = vmatprep.subr.mxu0 0.0
    %215 = vmatpush2.msra.mxu0 0.0
    %216 = vmatprep.subr.mxu0 0.0
    %217 = vmatpush2.msra.mxu0 0.0
    %218 = vmatprep.subr.mxu0 0.0
    %219 = vmatpush2.msra.mxu0 0.0
    %220 = vmatprep.subr.mxu0 0.0
    %221 = vmatpush2.msra.mxu0 0.0
    %222 = vmatprep.subr.mxu0 0.0
    %223 = vmatpush2.msra.mxu0 0.0
    %224 = vmatprep.subr.mxu0 0.0
    %225 = vmatpush2.msra.mxu0 0.0
    %226 = vmatprep.subr.mxu0 0.0
    %227 = vmatpush2.msra.mxu0 0.0
    %228 = vmatprep.subr.mxu0 0.0
    %229 = vmatpush2.msra.mxu0 0.0
    %230 = vmatprep.subr.mxu0 0.0
    %231 = vmatpush2.msra.mxu0 0.0
    %232 = vmatprep.subr.mxu0 0.0
    %233 = vmatpush2.msra.mxu0 0.0
    %234 = vmatprep.subr.mxu0 0.0
    %235 = vmatpush2.msra.mxu0 0.0
    %236 = vmatprep.subr.mxu0 0.0
    %237 = vmatpush2.msra.mxu0 0.0
    %238 = vmatprep.subr.mxu0 0.0
    %239 = vmatpush2.msra.mxu0 0.0
    %240 = vmatprep.subr.mxu0 0.0
    %241 = vmatpush2.msra.mxu0 0.0
    %242 = vmatprep.subr.mxu0 0.0
    %243 = vmatpush2.msra.mxu0 0.0
    %244 = vmatprep.mubr.f32.mxu0 0.0
    %245 = vmatmul.mubr.f32.gmra.mxu0 %v175
    %v246 = vpop.f32.mrf.mxu0
    %v247 = vadd.f32 %v166, %v246
    %v248 = vpop.f32.mrf.mxu0
    %249 = vmatprep.mubr.f32.mxu0 0.0
    %250 = vmatmul.mubr.f32.gmra.mxu0 %v178
    %v251 = vpop.f32.mrf.mxu0
    %v252 = vadd.f32 %v171, %v251
    %v253 = vpop.f32.mrf.mxu0
    %254 = vdwg.mxu0
    %v255 = vld [vmem:[%s5] sm:$0xff]
    %v256 = vld [vmem:[%s5 + $0x8] sm:$0xff]
    %258 = vset.pattern.permute.xlu0 0
    %259 = vperm.xlu0 %258, %v255
    %v260 = vpop.permute.xlu0 %259
    %263 = vset.pattern.permute.xlu0 0
    %264 = vperm.xlu0 %263, %v256
    %v265 = vpop.permute.xlu0 %264
    %v267 = vmax.f32 %v247, %v260
    %v268 = vmax.f32 %v252, %v265
    %v269 = vld [vmem:[%s6] sm:$0xff]
    %v270 = vld [vmem:[%s6 + $0x8] sm:$0xff]
    %272 = vset.pattern.permute.xlu0 0
    %273 = vperm.xlu0 %272, %v269
    %v274 = vpop.permute.xlu0 %273
    %277 = vset.pattern.permute.xlu0 0
    %278 = vperm.xlu0 %277, %v270
    %v279 = vpop.permute.xlu0 %278
    %v281 = vmin.f32 %v267, %v274
    %v282 = vmin.f32 %v268, %v279
    %283 = vst [vmem:[#allocation2] sm:$0xff] %v281
    %284 = vst [vmem:[#allocation2 + $0x8] sm:$0xff] %v282
    // Predicated region
    $region30: #{tpu_custom_call.1} parent=1 // pred_check
      _
    $region31: #{tpu_custom_call.1} parent=1 // pred_check_branch
      %286 = sbr.rel (0) target = $region33
    $region32: #{tpu_custom_call.1} parent=1 // pred_region
      %s288 = ssub.s32 256, 256
      %289 = vsyncadd [#allocation3], %s288
      %s290 = sshll.u32 [#allocation2], 4
      %s291 = int_to_ptr.vmem [resolvable:$true] %s290
      %296 = dma.vmem_to_hbm [thread:$0]  %s291, 256, %s7, [#allocation3], 128, 128, 8
    $region33: #{tpu_custom_call.1} parent=1 // pred_fallthru
      _
    // Predicated region
    $region34: #{tpu_custom_call.1} parent=1 // pred_check
      _
    $region35: #{tpu_custom_call.1} parent=1 // pred_check_branch
      %298 = sbr.rel (0) target = $region37
    $region36: #{tpu_custom_call.1} parent=1 // pred_region
      %299 = dma.done [#allocation3], 256
    $region37: #{tpu_custom_call.1} parent=1 // pred_fallthru
      _
    %300 = vsyncpa [#allocation3], 1

</llo_original>
